<compile_context>
chip_gen: v7x
topology: tpu7x:2x2x1
jax: 0.10.0
libtpu: 0.0.40
codegen_flags: <defaults>
</compile_context>

<pallas_src>
import functools

import jax
import jax.numpy as jnp
from jax import lax
from jax.experimental import pallas as pl
from jax.experimental.pallas import tpu as pltpu


# ---------------------------------------------------------------------------
# Pass 1: per-batch moment + folded per-batch affine weights.
#   grid = (B, N // TK), key axis is a reduction ("arbitrary").
# ---------------------------------------------------------------------------
def _moment_kernel(x_ref, wp_ref, bp_ref, wf_ref, bf_ref, wt_ref, btr_ref, bc_ref,
                   weff_ref, b2_ref, acc_ref, *, mm_dtype):
    """x_ref:[C,TK] f32, outputs weff:[C,C] mm_dtype, b2:[C,1] f32, acc:[C,Ci] f32."""
    k = pl.program_id(1)
    f32 = jnp.float32

    @pl.when(k == 0)
    def _():
        acc_ref[...] = jnp.zeros_like(acc_ref)

    x_blk = x_ref[...].astype(mm_dtype)                                          # [C, TK]
    # phi projection and (recover-conv + BN-scale)-folded g projection of this key tile.
    phi = jnp.dot(wp_ref[...], x_blk, preferred_element_type=f32) + bp_ref[...]  # [Ci, TK]
    gf = jnp.dot(wf_ref[...], x_blk, preferred_element_type=f32) + bf_ref[...]   # [C,  TK]

    # M += gf @ phi^T : contract the key-tile axis directly (no transpose temp).
    acc_ref[...] += lax.dot_general(
        gf.astype(mm_dtype), phi.astype(mm_dtype),
        dimension_numbers=(((1,), (1,)), ((), ())),
        preferred_element_type=f32)                                              # [C, Ci]

    @pl.when(k == pl.num_programs(1) - 1)
    def _():
        m = acc_ref[...]                                                         # [C, Ci] f32
        # Fold M with the (1/N-scaled) theta weights -> per-batch affine (kept in f32).
        weff_ref[...] = jnp.dot(m, wt_ref[...],
                                preferred_element_type=f32).astype(weff_ref.dtype)
        # b2 = M @ (b_theta/N) + bc  via a lane reduction (btr is a [1, Ci] row).
        b2_ref[...] = (jnp.sum(m * btr_ref[...], axis=1, keepdims=True)
                       + bc_ref[...])


# ---------------------------------------------------------------------------
# Pass 2: query-tiled affine + residual.  grid = (B, N // TQ), both "parallel".
# ---------------------------------------------------------------------------
def _apply_kernel(x_ref, weff_ref, b2_ref, o_ref, *, mm_dtype):
    """x_ref:[C,TQ] f32, weff:[C,C] mm_dtype, b2:[C,1] f32, o_ref:[C,TQ]."""
    x_q = x_ref[...]                                                             # [C, TQ] f32
    out = jnp.dot(weff_ref[...], x_q.astype(mm_dtype),
                  preferred_element_type=jnp.float32)                            # [C, TQ]
    o_ref[...] = (out + b2_ref[...] + x_q).astype(o_ref.dtype)


# ---------------------------------------------------------------------------
# Wrapper.
# ---------------------------------------------------------------------------
def _round_up(v, m):
    return (v + m - 1) // m * m


def _vmem_capacity_bytes(default=128 << 20):
    try:
        cap = getattr(pltpu.get_tpu_info(), "vmem_capacity_bytes", None)
        if cap:
            return int(cap)
    except Exception:
        pass
    return default


def _pick_tile(n, c, budget_bytes, bytes_per_col=24):
    """Largest multiple-of-128 divisor of n whose per-step tiles fit the budget.

    Falls back to the full extent n (always a legal block shape) when n has no
    128-multiple divisor; the O(N^2) attention tile no longer exists, so the
    fallback cost is just a larger (but bounded) x tile.
    """
    divs = [t for t in range(128, n + 1, 128) if n % t == 0]
    if not divs:
        return n
    fitting = [t for t in divs if t * c * bytes_per_col <= budget_bytes]
    return max(fitting) if fitting else min(divs)


def non_local_forward(x_nchw, params, *, tile_q=None, tile_k=None,
                      matmul_dtype=jnp.bfloat16, bn_eps=1e-5):
    """NonLocal forward. x_nchw: [B, C, H, W] float32 -> same shape/dtype.

    BatchNorm is applied in inference form (running stats), matching the
    module's eval-time forward.
    """
    B, C, H, W = x_nchw.shape
    N = H * W
    f32 = jnp.float32

    w_theta = params["w_theta"].astype(f32)
    b_theta = params["b_theta"].astype(f32)
    w_phi, b_phi = params["w_phi"].astype(f32), params["b_phi"].astype(f32)
    w_g, b_g = params["w_g"].astype(f32), params["b_g"].astype(f32)
    w_rec, b_rec = params["w_rec"].astype(f32), params["b_rec"].astype(f32)
    Ci = w_theta.shape[0]

    # BatchNorm2d (inference form: running stats) -> per-channel scale/shift.
    scale = params["bn_gamma"] / jnp.sqrt(params["bn_var"] + bn_eps)             # [C]
    shift = params["bn_beta"] - params["bn_mean"] * scale                        # [C]

    # All folds computed in f32; cast to matmul_dtype only at the MXU operands.
    wt = w_theta * (1.0 / N)                                                     # [Ci, C] f32
    bt_row = (b_theta * (1.0 / N)).reshape(1, Ci)                                # [1, Ci] f32
    wp = w_phi.astype(matmul_dtype)                                              # [Ci, C]
    bp = b_phi.reshape(Ci, 1)                                                    # [Ci, 1] f32
    wf = (scale[:, None] * (w_rec @ w_g)).astype(matmul_dtype)                   # [C, C]
    bf = (scale * (w_rec @ b_g)).reshape(C, 1)     # travels inside the attention sum
    bc = (scale * b_rec + shift).reshape(C, 1)     # outside the attention sum

    # NCHW -> [B, C, N] is a free reshape (N already on the lane axis).
    x_bcn = x_nchw.reshape(B, C, N)

    # Generation-aware tile / VMEM budgets (v7x: 64 MiB per TC, v5e/v6e: 128 MiB).
    cap = _vmem_capacity_bytes()
    small_vmem = cap <= (64 << 20)
    tile_budget = (8 << 20) if small_vmem else (16 << 20)
    if tile_k is None:
        tile_k = _pick_tile(N, C, tile_budget)
    if tile_q is None:
        tile_q = _pick_tile(N, C, tile_budget)
    assert N % tile_k == 0, f"key tile {tile_k} must divide N={N}"
    assert N % tile_q == 0, f"query tile {tile_q} must divide N={N}"
    nk, nq = N // tile_k, N // tile_q

    mm_bytes = jnp.dtype(matmul_dtype).itemsize
    c_p, ci_p = _round_up(C, 8), _round_up(Ci, 8)
    c_lane, ci_lane = _round_up(C, 128), _round_up(Ci, 128)
    tk_p, tq_p = _round_up(tile_k, 128), _round_up(tile_q, 128)

    def clamp_vmem(est):
        hi = int(cap * 3 // 4)                      # 48 MiB on v7x, 96 MiB on v5e/v6e
        lo = min(32 << 20, hi)
        return int(min(max(est, lo), hi))

    est1 = (2 * c_p * tk_p * 4                          # double-buffered x key tile
            + (c_p + ci_p) * tk_p * (4 + mm_bytes)      # phi / gf temps + bf16 casts
            + c_p * ci_lane * 4                         # f32 accumulator
            + 2 * (c_p * c_lane * mm_bytes + c_p * 128 * 4)   # weff / b2 out buffers
            + (ci_p + c_p) * c_lane * (mm_bytes + 4)    # weights
            + (4 << 20))                                # headroom
    est2 = (4 * c_p * tq_p * 4                          # x + out double buffers
            + c_p * tq_p * mm_bytes                     # cast temp
            + c_p * c_lane * mm_bytes + c_p * 128 * 4   # weff / b2
            + (4 << 20))

    x_bytes = int(x_nchw.dtype.itemsize)
    k1_flops = 2 * B * N * C * (2 * Ci + C) + 2 * B * C * Ci * C
    k1_bytes = (B * C * N * x_bytes + B * (C * C * mm_bytes + C * 4)
                + (2 * Ci * C + C * C) * 4)
    k2_flops = 2 * B * N * C * C
    k2_bytes = 2 * B * C * N * x_bytes + B * (C * C * mm_bytes + C * 4)

    def rep(shape):
        return pl.BlockSpec(shape, lambda b, k: (0,) * len(shape))

    # ---- pass 1: per-batch folded affine (W_eff, b2) -------------------------
    weff, b2 = pl.pallas_call(
        functools.partial(_moment_kernel, mm_dtype=matmul_dtype),
        out_shape=(jax.ShapeDtypeStruct((B, C, C), matmul_dtype),
                   jax.ShapeDtypeStruct((B, C, 1), f32)),
        grid=(B, nk),
        in_specs=[
            pl.BlockSpec((None, C, tile_k), lambda b, k: (b, 0, k)),  # x key tile
            rep((Ci, C)), rep((Ci, 1)),        # phi weight / bias
            rep((C, C)), rep((C, 1)),          # folded g*recover*BNscale weight / bias
            rep((Ci, C)), rep((1, Ci)),        # theta weight / bias (1/N folded), f32
            rep((C, 1)),                       # per-channel constant (outside the sum)
        ],
        out_specs=(pl.BlockSpec((None, C, C), lambda b, k: (b, 0, 0)),
                   pl.BlockSpec((None, C, 1), lambda b, k: (b, 0, 0))),
        scratch_shapes=[pltpu.VMEM((C, Ci), f32)],
        compiler_params=pltpu.CompilerParams(
            dimension_semantics=("parallel", "arbitrary"),
            vmem_limit_bytes=clamp_vmem(est1)),
        cost_estimate=pl.CostEstimate(flops=k1_flops, transcendentals=0,
                                      bytes_accessed=k1_bytes),
    )(x_bcn, wp, bp, wf, bf, wt, bt_row, bc)

    # ---- pass 2: query-tiled affine + residual -------------------------------
    y_bcn = pl.pallas_call(
        functools.partial(_apply_kernel, mm_dtype=matmul_dtype),
        out_shape=jax.ShapeDtypeStruct((B, C, N), x_nchw.dtype),
        grid=(B, nq),
        in_specs=[
            pl.BlockSpec((None, C, tile_q), lambda b, q: (b, 0, q)),  # x query tile
            pl.BlockSpec((None, C, C), lambda b, q: (b, 0, 0)),       # W_eff (per batch)
            pl.BlockSpec((None, C, 1), lambda b, q: (b, 0, 0)),       # b2 (per batch)
        ],
        out_specs=pl.BlockSpec((None, C, tile_q), lambda b, q: (b, 0, q)),
        compiler_params=pltpu.CompilerParams(
            dimension_semantics=("parallel", "parallel"),
            vmem_limit_bytes=clamp_vmem(est2)),
        cost_estimate=pl.CostEstimate(flops=k2_flops, transcendentals=0,
                                      bytes_accessed=k2_bytes),
    )(x_bcn, weff, b2)

    return y_bcn.reshape(B, C, H, W)


# ---------------------------------------------------------------------------
# Pure-JAX reference mirroring the PyTorch forward exactly (f32, eval-mode BN).
# ---------------------------------------------------------------------------
def non_local_reference(x, params, bn_eps=1e-5):
    B, C, H, W = x.shape
    N = H * W
    xf = x.reshape(B, C, N).astype(jnp.float32)

    def conv1x1(w, b):
        return jnp.einsum("oc,bcn->bon", w, xf) + b[None, :, None]

    theta = conv1x1(params["w_theta"], params["b_theta"])                 # [B, Ci, N]
    phi = conv1x1(params["w_phi"], params["b_phi"])                       # [B, Ci, N]
    g = conv1x1(params["w_g"], params["b_g"])                             # [B, Ci, N]
    attn = jnp.einsum("bci,bcj->bij", theta, phi) / N                     # [B, N, N]
    out = jnp.einsum("bij,bcj->bci", attn, g)                             # [B, Ci, N]
    rec = jnp.einsum("oc,bcn->bon", params["w_rec"], out) + params["b_rec"][None, :, None]
    scale = params["bn_gamma"] / jnp.sqrt(params["bn_var"] + bn_eps)
    shift = params["bn_beta"] - params["bn_mean"] * scale
    y = rec * scale[None, :, None] + shift[None, :, None] + xf
    return y.reshape(B, C, H, W).astype(x.dtype)


def init_params(key, in_channels, ratio=2):
    """Parameters of the NonLocal module (Conv2d 1x1 weights stored as [cout, cin])."""
    Ci = in_channels // ratio
    ks = jax.random.split(key, 8)

    def cw(k, cout, cin):
        return jax.random.normal(k, (cout, cin), jnp.float32) * 0.1

    def cb(k, cout):
        return jax.random.normal(k, (cout,), jnp.float32) * 0.1

    return {
        "w_theta": cw(ks[0], Ci, in_channels), "b_theta": cb(ks[1], Ci),
        "w_phi":   cw(ks[2], Ci, in_channels), "b_phi":   cb(ks[3], Ci),
        "w_g":     cw(ks[4], Ci, in_channels), "b_g":     cb(ks[5], Ci),
        "w_rec":   cw(ks[6], in_channels, Ci), "b_rec":   cb(ks[7], in_channels),
        # The module zero-inits the BN weight/bias; running stats at defaults.
        "bn_gamma": jnp.zeros((in_channels,), jnp.float32),
        "bn_beta":  jnp.zeros((in_channels,), jnp.float32),
        "bn_mean":  jnp.zeros((in_channels,), jnp.float32),
        "bn_var":   jnp.ones((in_channels,), jnp.float32),
    }


if __name__ == "__main__":
    key = jax.random.PRNGKey(0)
    k_x, k_p = jax.random.split(key)

    B, C, H, W = 2, 4, 16, 16   # in_channels=4, ratio=2 -> inter_channels=2, N=256
    x = jax.random.normal(k_x, (B, C, H, W), jnp.float32)
    params = init_params(k_p, in_channels=C, ratio=2)

    # Spec-faithful forward (BN gamma=0 at init -> output == x). Multi-tile path.
    y = non_local_forward(x, params, tile_q=128, tile_k=128)
    jax.block_until_ready(y)
    assert y.shape == x.shape and y.dtype == x.dtype
    assert jnp.allclose(y, non_local_reference(x, params), atol=2e-3, rtol=2e-3)

    # Self-check with non-degenerate BN params so the attention path is exercised.
    params_live = dict(params,
                       bn_gamma=jnp.ones((C,), jnp.float32),
                       bn_beta=0.05 * jnp.ones((C,), jnp.float32),
                       bn_mean=0.01 * jnp.ones((C,), jnp.float32),
                       bn_var=0.9 * jnp.ones((C,), jnp.float32))
    y_ref_live = non_local_reference(x, params_live)
    y_live_tiled = non_local_forward(x, params_live, tile_q=128, tile_k=128)  # multi-tile
    y_live_auto = non_local_forward(x, params_live)                           # auto tiles
    jax.block_until_ready((y_live_tiled, y_live_auto))
    assert jnp.allclose(y_live_tiled, y_ref_live, atol=3e-3, rtol=3e-3)
    assert jnp.allclose(y_live_auto, y_ref_live, atol=3e-3, rtol=3e-3)

    print("KERNEL_OK")
</pallas_src>

<mosaic_0001>
module attributes {stable_mosaic.version = 11 : i64} {
  func.func @_moment_kernel(%arg0: i32, %arg1: i32, %arg2: memref<1x4x128xf32, #tpu.memory_space<vmem>>, %arg3: memref<2x4xbf16, #tpu.memory_space<vmem>>, %arg4: memref<2x1xf32, #tpu.memory_space<vmem>>, %arg5: memref<4x4xbf16, #tpu.memory_space<vmem>>, %arg6: memref<4x1xf32, #tpu.memory_space<vmem>>, %arg7: memref<2x4xf32, #tpu.memory_space<vmem>>, %arg8: memref<1x2xf32, #tpu.memory_space<vmem>>, %arg9: memref<4x1xf32, #tpu.memory_space<vmem>>, %arg10: memref<1x4x4xbf16, #tpu.memory_space<vmem>>, %arg11: memref<1x4x1xf32, #tpu.memory_space<vmem>>, %arg12: memref<4x2xf32, #tpu.memory_space<vmem>>) attributes {dimension_semantics = [#tpu.dimension_semantics<parallel>, #tpu.dimension_semantics<arbitrary>], iteration_bounds = array<i64: 2, 2>, scalar_prefetch = 0 : i64, scratch_operands = 1 : i64, tpu.core_type = #tpu.core_type<tc>, window_params = [{transform_indices = @transform_0, window_bounds = array<i64: 1, 4, 128>}, {pipeline_mode = #tpu.pipeline_mode<synchronous>, transform_indices = @transform_1, window_bounds = array<i64: 2, 4>}, {pipeline_mode = #tpu.pipeline_mode<synchronous>, transform_indices = @transform_2, window_bounds = array<i64: 2, 1>}, {pipeline_mode = #tpu.pipeline_mode<synchronous>, transform_indices = @transform_3, window_bounds = array<i64: 4, 4>}, {pipeline_mode = #tpu.pipeline_mode<synchronous>, transform_indices = @transform_4, window_bounds = array<i64: 4, 1>}, {pipeline_mode = #tpu.pipeline_mode<synchronous>, transform_indices = @transform_5, window_bounds = array<i64: 2, 4>}, {pipeline_mode = #tpu.pipeline_mode<synchronous>, transform_indices = @transform_6, window_bounds = array<i64: 1, 2>}, {pipeline_mode = #tpu.pipeline_mode<synchronous>, transform_indices = @transform_7, window_bounds = array<i64: 4, 1>}, {transform_indices = @transform_8, window_bounds = array<i64: 1, 4, 4>}, {transform_indices = @transform_9, window_bounds = array<i64: 1, 4, 1>}]} {
    %c0_i32 = arith.constant 0 : i32
    %0 = arith.cmpi eq, %arg1, %c0_i32 : i32
    %1 = arith.extui %0 : i1 to i32
    %c0_i32_0 = arith.constant 0 : i32
    %2 = arith.cmpi ne, %1, %c0_i32_0 : i32
    scf.if %2 {
      %cst_18 = arith.constant 0.000000e+00 : f32
      %25 = vector.broadcast %cst_18 : f32 to vector<4x2xf32>
      %c0_19 = arith.constant 0 : index
      %c0_20 = arith.constant 0 : index
      %26 = vector.load %arg12[%c0_19, %c0_20] : memref<4x2xf32, #tpu.memory_space<vmem>>, vector<4x2xf32>
      tpu.vector_store %arg12[%c0_19, %c0_20], %25 {strides = array<i32>} : memref<4x2xf32, #tpu.memory_space<vmem>>, vector<4x2xf32>,
    } else {
    }
    %c0 = arith.constant 0 : index
    %c0_1 = arith.constant 0 : index
    %c0_2 = arith.constant 0 : index
    %3 = vector.load %arg2[%c0, %c0_1, %c0_2] : memref<1x4x128xf32, #tpu.memory_space<vmem>>, vector<1x4x128xf32>
    %4 = vector.shape_cast %3 : vector<1x4x128xf32> to vector<4x128xf32>
    %5 = arith.truncf %4 : vector<4x128xf32> to vector<4x128xbf16>
    %c0_3 = arith.constant 0 : index
    %c0_4 = arith.constant 0 : index
    %6 = vector.load %arg3[%c0_3, %c0_4] : memref<2x4xbf16, #tpu.memory_space<vmem>>, vector<2x4xbf16>
    %cst = arith.constant dense<0.000000e+00> : vector<2x128xf32>
    %7 = tpu.matmul %6, %5, %cst {dimension_numbers = #tpu.dot_dimension_numbers<[1], [0], [0], [1], [0, 0, 1, 1], [], []>} : vector<2x4xbf16>, vector<4x128xbf16>, vector<2x128xf32> -> vector<2x128xf32>
    %c0_5 = arith.constant 0 : index
    %c0_6 = arith.constant 0 : index
    %8 = vector.load %arg4[%c0_5, %c0_6] : memref<2x1xf32, #tpu.memory_space<vmem>>, vector<2x1xf32>
    %9 = vector.broadcast %8 : vector<2x1xf32> to vector<2x128xf32>
    %10 = arith.addf %7, %9 : vector<2x128xf32>
    %c0_7 = arith.constant 0 : index
    %c0_8 = arith.constant 0 : index
    %11 = vector.load %arg5[%c0_7, %c0_8] : memref<4x4xbf16, #tpu.memory_space<vmem>>, vector<4x4xbf16>
    %cst_9 = arith.constant dense<0.000000e+00> : vector<4x128xf32>
    %12 = tpu.matmul %11, %5, %cst_9 {dimension_numbers = #tpu.dot_dimension_numbers<[1], [0], [0], [1], [0, 0, 1, 1], [], []>} : vector<4x4xbf16>, vector<4x128xbf16>, vector<4x128xf32> -> vector<4x128xf32>
    %c0_10 = arith.constant 0 : index
    %c0_11 = arith.constant 0 : index
    %13 = vector.load %arg6[%c0_10, %c0_11] : memref<4x1xf32, #tpu.memory_space<vmem>>, vector<4x1xf32>
    %14 = vector.broadcast %13 : vector<4x1xf32> to vector<4x128xf32>
    %15 = arith.addf %12, %14 : vector<4x128xf32>
    %c0_12 = arith.constant 0 : index
    %c0_13 = arith.constant 0 : index
    %16 = vector.load %arg12[%c0_12, %c0_13] : memref<4x2xf32, #tpu.memory_space<vmem>>, vector<4x2xf32>
    %17 = arith.truncf %15 : vector<4x128xf32> to vector<4x128xbf16>
    %18 = arith.truncf %10 : vector<2x128xf32> to vector<2x128xbf16>
    %cst_14 = arith.constant dense<0.000000e+00> : vector<4x2xf32>
    %19 = tpu.matmul %17, %18, %cst_14 {dimension_numbers = #tpu.dot_dimension_numbers<[1], [1], [0], [0], [0, 0, 1, 0], [], []>} : vector<4x128xbf16>, vector<2x128xbf16>, vector<4x2xf32> -> vector<4x2xf32>
    %20 = arith.addf %16, %19 : vector<4x2xf32>
    %c0_15 = arith.constant 0 : index
    %c0_16 = arith.constant 0 : index
    %21 = vector.load %arg12[%c0_15, %c0_16] : memref<4x2xf32, #tpu.memory_space<vmem>>, vector<4x2xf32>
    tpu.vector_store %arg12[%c0_15, %c0_16], %20 {strides = array<i32>} : memref<4x2xf32, #tpu.memory_space<vmem>>, vector<4x2xf32>,
    %c1_i32 = arith.constant 1 : i32
    %22 = arith.cmpi eq, %arg1, %c1_i32 : i32
    %23 = arith.extui %22 : i1 to i32
    %c0_i32_17 = arith.constant 0 : i32
    %24 = arith.cmpi ne, %23, %c0_i32_17 : i32
    scf.if %24 {
      %c0_18 = arith.constant 0 : index
      %c0_19 = arith.constant 0 : index
      %25 = vector.load %arg12[%c0_18, %c0_19] : memref<4x2xf32, #tpu.memory_space<vmem>>, vector<4x2xf32>
      %c0_20 = arith.constant 0 : index
      %c0_21 = arith.constant 0 : index
      %26 = vector.load %arg7[%c0_20, %c0_21] : memref<2x4xf32, #tpu.memory_space<vmem>>, vector<2x4xf32>
      %cst_22 = arith.constant dense<0.000000e+00> : vector<4x4xf32>
      %27 = tpu.matmul %25, %26, %cst_22 {dimension_numbers = #tpu.dot_dimension_numbers<[1], [0], [0], [1], [0, 0, 1, 1], [], []>} : vector<4x2xf32>, vector<2x4xf32>, vector<4x4xf32> -> vector<4x4xf32>
      %28 = arith.truncf %27 : vector<4x4xf32> to vector<4x4xbf16>
      %c0_23 = arith.constant 0 : index
      %c0_24 = arith.constant 0 : index
      %c0_25 = arith.constant 0 : index
      %29 = vector.load %arg10[%c0_23, %c0_24, %c0_25] : memref<1x4x4xbf16, #tpu.memory_space<vmem>>, vector<1x4x4xbf16>
      %30 = vector.shape_cast %29 : vector<1x4x4xbf16> to vector<4x4xbf16>
      %31 = vector.shape_cast %28 : vector<4x4xbf16> to vector<1x4x4xbf16>
      tpu.vector_store %arg10[%c0_23, %c0_24, %c0_25], %31 {strides = array<i32>} : memref<1x4x4xbf16, #tpu.memory_space<vmem>>, vector<1x4x4xbf16>,
      %c0_26 = arith.constant 0 : index
      %c0_27 = arith.constant 0 : index
      %32 = vector.load %arg8[%c0_26, %c0_27] : memref<1x2xf32, #tpu.memory_space<vmem>>, vector<1x2xf32>
      %33 = vector.broadcast %32 : vector<1x2xf32> to vector<4x2xf32>
      %34 = arith.mulf %25, %33 : vector<4x2xf32>
      %cst_28 = arith.constant dense<0.000000e+00> : vector<4xf32>
      %35 = vector.multi_reduction <add>, %34, %cst_28 [1] : vector<4x2xf32> to vector<4xf32>
      %36 = vector.shape_cast %35 : vector<4xf32> to vector<4x1xf32>
      %c0_29 = arith.constant 0 : index
      %c0_30 = arith.constant 0 : index
      %37 = vector.load %arg9[%c0_29, %c0_30] : memref<4x1xf32, #tpu.memory_space<vmem>>, vector<4x1xf32>
      %38 = arith.addf %36, %37 : vector<4x1xf32>
      %c0_31 = arith.constant 0 : index
      %c0_32 = arith.constant 0 : index
      %c0_33 = arith.constant 0 : index
      %39 = vector.load %arg11[%c0_31, %c0_32, %c0_33] : memref<1x4x1xf32, #tpu.memory_space<vmem>>, vector<1x4x1xf32>
      %40 = vector.shape_cast %39 : vector<1x4x1xf32> to vector<4x1xf32>
      %41 = vector.shape_cast %38 : vector<4x1xf32> to vector<1x4x1xf32>
      tpu.vector_store %arg11[%c0_31, %c0_32, %c0_33], %41 {strides = array<i32>} : memref<1x4x1xf32, #tpu.memory_space<vmem>>, vector<1x4x1xf32>,
    } else {
    }
    return
  }
  func.func @transform_0(%arg0: i32, %arg1: i32) -> (i32, i32, i32) {
    %c0_i32 = arith.constant 0 : i32
    %c0_i32_0 = arith.constant 0 : i32
    return %arg0, %c0_i32, %arg1 : i32, i32, i32
  }
  func.func @transform_1(%arg0: i32, %arg1: i32) -> (i32, i32) {
    %c0_i32 = arith.constant 0 : i32
    %c0_i32_0 = arith.constant 0 : i32
    %c0_i32_1 = arith.constant 0 : i32
    return %c0_i32, %c0_i32_0 : i32, i32
  }
  func.func @transform_2(%arg0: i32, %arg1: i32) -> (i32, i32) {
    %c0_i32 = arith.constant 0 : i32
    %c0_i32_0 = arith.constant 0 : i32
    %c0_i32_1 = arith.constant 0 : i32
    return %c0_i32, %c0_i32_0 : i32, i32
  }
  func.func @transform_3(%arg0: i32, %arg1: i32) -> (i32, i32) {
    %c0_i32 = arith.constant 0 : i32
    %c0_i32_0 = arith.constant 0 : i32
    %c0_i32_1 = arith.constant 0 : i32
    return %c0_i32, %c0_i32_0 : i32, i32
  }
  func.func @transform_4(%arg0: i32, %arg1: i32) -> (i32, i32) {
    %c0_i32 = arith.constant 0 : i32
    %c0_i32_0 = arith.constant 0 : i32
    %c0_i32_1 = arith.constant 0 : i32
    return %c0_i32, %c0_i32_0 : i32, i32
  }
  func.func @transform_5(%arg0: i32, %arg1: i32) -> (i32, i32) {
    %c0_i32 = arith.constant 0 : i32
    %c0_i32_0 = arith.constant 0 : i32
    %c0_i32_1 = arith.constant 0 : i32
    return %c0_i32, %c0_i32_0 : i32, i32
  }
  func.func @transform_6(%arg0: i32, %arg1: i32) -> (i32, i32) {
    %c0_i32 = arith.constant 0 : i32
    %c0_i32_0 = arith.constant 0 : i32
    %c0_i32_1 = arith.constant 0 : i32
    return %c0_i32, %c0_i32_0 : i32, i32
  }
  func.func @transform_7(%arg0: i32, %arg1: i32) -> (i32, i32) {
    %c0_i32 = arith.constant 0 : i32
    %c0_i32_0 = arith.constant 0 : i32
    %c0_i32_1 = arith.constant 0 : i32
    return %c0_i32, %c0_i32_0 : i32, i32
  }
  func.func @transform_8(%arg0: i32, %arg1: i32) -> (i32, i32, i32) {
    %c0_i32 = arith.constant 0 : i32
    %c0_i32_0 = arith.constant 0 : i32
    %c0_i32_1 = arith.constant 0 : i32
    return %arg0, %c0_i32, %c0_i32_0 : i32, i32, i32
  }
  func.func @transform_9(%arg0: i32, %arg1: i32) -> (i32, i32, i32) {
    %c0_i32 = arith.constant 0 : i32
    %c0_i32_0 = arith.constant 0 : i32
    %c0_i32_1 = arith.constant 0 : i32
    return %arg0, %c0_i32, %c0_i32_0 : i32, i32, i32
  }
}

</mosaic_0001>

<llo_original>
// kernel: tpu_custom_call.1
$region0: #{tpu_custom_call.1}
  #allocation0 [shape = 'u32[]', space=smem, size = 0x4, offset = 0x4, fixed_abs, tag = 'smem constant byte address 0x4 - core index']
  #allocation1 [shape = 'u32[144,128]{1,0:T(1,128)}', space=vmem, size = 0x12000, scoped, tag = 'internal scratch']
  #allocation2 [shape = 'f32[4,2]{1,0:T(4,128)}', space=vmem, size = 0x800, scoped, tag = 'scratch operand']
  %s0 = inlined_call_operand.hbm [shape: f32[2,4,256], index: 0, kind: input, shape index: {}]
  %s1 = inlined_call_operand.vmem [shape: bf16[2,4], index: 1, kind: input, shape index: {}]
  %s2 = inlined_call_operand.vmem [shape: f32[2,1], index: 2, kind: input, shape index: {}]
  %s3 = inlined_call_operand.vmem [shape: bf16[4,4], index: 3, kind: input, shape index: {}]
  %s4 = inlined_call_operand.vmem [shape: f32[4,1], index: 4, kind: input, shape index: {}]
  %s5 = inlined_call_operand.vmem [shape: f32[2,4], index: 5, kind: input, shape index: {}]
  %s6 = inlined_call_operand.vmem [shape: f32[1,2], index: 6, kind: input, shape index: {}]
  %s7 = inlined_call_operand.vmem [shape: f32[4,1], index: 7, kind: input, shape index: {}]
  %s8 = inlined_call_operand.hbm [shape: bf16[2,4,4], index: 8, kind: output, shape index: {0}]
  %s9 = inlined_call_operand.vmem [shape: f32[2,4,1], index: 9, kind: output, shape index: {1}]
  %10 = xla_tuple %s8, %s9
  %s11 = sld [smem:[#allocation0]]
  $region85: #{tpu_custom_call.1} parent=0
    _
  %s13 = ssub.s32 1, %s11
  %s14 = scalar_select 0, %s13, %s11
  $region1: #{tpu_custom_call.1} parent=0
    #allocation3 [shape = 'u8[4096]{0}', space=vmem, size = 0x1000, scoped, tag = 'input window, operand 0']
    #allocation4 [shape = 's32[2]{0}', space=sflag, size = 0x8, scoped, tag = 'scoped memory for tpu_custom_call.1']
    #allocation5 [shape = 's32[2]{0}', space=sflag, size = 0x8, scoped, tag = 'scoped memory for tpu_custom_call.1']
    #allocation6 [shape = 'u8[2048]{0}', space=vmem, size = 0x800, scoped, tag = 'output window, operand 0']
    %15 = vsyncpa [#allocation4], 0
    %s16 = scalar_lea.sflag [#allocation4], 1
    %17 = vsyncpa %s16, 0
    %18 = vsyncpa [#allocation5], 0
    %s19 = scalar_lea.sflag [#allocation5], 1
    %20 = vsyncpa %s19, 0
    loop: start=0, step=1, limit=6
    $region2: #{tpu_custom_call.1} parent=1 // loop_pre_header
      _
    $region3: #{tpu_custom_call.1} parent=1 // loop_header
      %s22 = sphi 0, %s26
      %p23 = scmp.ge.s32.totalorder %s22, 6
      %s29 = sphi 0, %s41
      %s30 = sphi 0, %s37
      %s31 = sphi 0, %s29
      %s32 = sphi 0, %s30
      %s33 = sphi 0, %s31
      %s34 = sphi 0, %s32
      %s46 = sphi 0, %s48
      %s49 = sphi 0, %s46
      %s50 = sphi 0, %s49
      %s66 = sphi 0, %s50
      %s70 = sphi 0, %s70
      %s72 = sphi 0, %s70
      %s73 = sphi 0, %s72
      %s87 = sphi 0, %s73
      %s91 = sphi 0, %s91
      %s93 = sphi 0, %s91
      %s94 = sphi 0, %s93
      %s108 = sphi 0, %s94
      %s112 = sphi 0, %s112
      %s114 = sphi 0, %s112
      %s115 = sphi 0, %s114
      %s129 = sphi 0, %s115
      %s133 = sphi 0, %s133
      %s135 = sphi 0, %s133
      %s136 = sphi 0, %s135
      %s150 = sphi 0, %s136
      %s154 = sphi 0, %s154
      %s156 = sphi 0, %s154
      %s157 = sphi 0, %s156
      %s171 = sphi 0, %s157
      %s175 = sphi 0, %s175
      %s177 = sphi 0, %s175
      %s178 = sphi 0, %s177
      %s192 = sphi 0, %s178
      %s196 = sphi 0, %s196
      %s198 = sphi 0, %s196
      %s199 = sphi 0, %s198
      %s213 = sphi 0, %s199
      %s219 = sphi 0, %s221
      %s222 = sphi 0, %s219
      %s223 = sphi 0, %s222
      %s239 = sphi 0, %s223
      %s245 = sphi 0, %s247
      %s248 = sphi 0, %s245
      %s249 = sphi 0, %s248
      %s265 = sphi 0, %s249
    $region4: #{tpu_custom_call.1} parent=1 // loop_header_branch
      %25 = sbr.rel (%p23) target = $region8
    $region5: #{tpu_custom_call.1} parent=1 // loop_body
      %s27 = ssub.s32 %s22, 1
      %s28 = ssub.s32 %s22, 2
      %s35 = sadd.s32 1, %s30
      %p36 = scmp.ge.s32.totalorder %s35, 2
      %s37 = scalar_select %p36, 0, %s35
      %s38 = sadd.s32 1, %s29
      %s39 = scalar_select %p36, %s38, %s29
      %p40 = scmp.ge.s32.totalorder %s39, 2
      %s41 = scalar_select %p40, 0, %s39
      %s42 = ssub.s32 %s29, %s41
      %s43 = ssub.s32 %s30, %s37
      %s44 = sor.u32 %s42, %s43
      %p45 = scmp.eq.s32.totalorder %s44, 0
      %s47 = sadd.s32 %s46, 1
      %s48 = scalar_select %p45, %s46, %s47
      %p51 = pneg %p45
      %p52 = scmp.eq.s32.totalorder %s22, 3
      %p53 = por %p51, %p52
      %p54 = scmp.ne.s32.totalorder %s46, %s49
      %p55 = scmp.eq.s32.totalorder %s22, 0
      %p56 = por %p54, %p55
      %p57 = scmp.ne.s32.totalorder %s46, %s49
      %p58 = scmp.eq.s32.totalorder %s27, 3
      %p59 = por %p57, %p58
      %p60 = scmp.ne.s32.totalorder %s49, %s50
      %p61 = scmp.eq.s32.totalorder %s27, 0
      %p62 = por %p60, %p61
      %p63 = scmp.ne.s32.totalorder %s49, %s50
      %p64 = scmp.eq.s32.totalorder %s28, 3
      %p65 = por %p63, %p64
      %p67 = scmp.ne.s32.totalorder %s50, %s66
      %p68 = scmp.eq.s32.totalorder %s28, 0
      %p69 = por %p67, %p68
      %s71 = sadd.s32 %s70, 1
      %p74 = scmp.eq.s32.totalorder %s22, 3
      %p75 = scmp.ne.s32.totalorder %s70, %s72
      %p76 = scmp.eq.s32.totalorder %s22, 0
      %p77 = por %p75, %p76
      %p78 = scmp.ne.s32.totalorder %s70, %s72
      %p79 = scmp.eq.s32.totalorder %s27, 3
      %p80 = por %p78, %p79
      %p81 = scmp.ne.s32.totalorder %s72, %s73
      %p82 = scmp.eq.s32.totalorder %s27, 0
      %p83 = por %p81, %p82
      %p84 = scmp.ne.s32.totalorder %s72, %s73
      %p85 = scmp.eq.s32.totalorder %s28, 3
      %p86 = por %p84, %p85
      %p88 = scmp.ne.s32.totalorder %s73, %s87
      %p89 = scmp.eq.s32.totalorder %s28, 0
      %p90 = por %p88, %p89
      %s92 = sadd.s32 %s91, 1
      %p95 = scmp.eq.s32.totalorder %s22, 3
      %p96 = scmp.ne.s32.totalorder %s91, %s93
      %p97 = scmp.eq.s32.totalorder %s22, 0
      %p98 = por %p96, %p97
      %p99 = scmp.ne.s32.totalorder %s91, %s93
      %p100 = scmp.eq.s32.totalorder %s27, 3
      %p101 = por %p99, %p100
      %p102 = scmp.ne.s32.totalorder %s93, %s94
      %p103 = scmp.eq.s32.totalorder %s27, 0
      %p104 = por %p102, %p103
      %p105 = scmp.ne.s32.totalorder %s93, %s94
      %p106 = scmp.eq.s32.totalorder %s28, 3
      %p107 = por %p105, %p106
      %p109 = scmp.ne.s32.totalorder %s94, %s108
      %p110 = scmp.eq.s32.totalorder %s28, 0
      %p111 = por %p109, %p110
      %s113 = sadd.s32 %s112, 1
      %p116 = scmp.eq.s32.totalorder %s22, 3
      %p117 = scmp.ne.s32.totalorder %s112, %s114
      %p118 = scmp.eq.s32.totalorder %s22, 0
      %p119 = por %p117, %p118
      %p120 = scmp.ne.s32.totalorder %s112, %s114
      %p121 = scmp.eq.s32.totalorder %s27, 3
      %p122 = por %p120, %p121
      %p123 = scmp.ne.s32.totalorder %s114, %s115
      %p124 = scmp.eq.s32.totalorder %s27, 0
      %p125 = por %p123, %p124
      %p126 = scmp.ne.s32.totalorder %s114, %s115
      %p127 = scmp.eq.s32.totalorder %s28, 3
      %p128 = por %p126, %p127
      %p130 = scmp.ne.s32.totalorder %s115, %s129
      %p131 = scmp.eq.s32.totalorder %s28, 0
      %p132 = por %p130, %p131
      %s134 = sadd.s32 %s133, 1
      %p137 = scmp.eq.s32.totalorder %s22, 3
      %p138 = scmp.ne.s32.totalorder %s133, %s135
      %p139 = scmp.eq.s32.totalorder %s22, 0
      %p140 = por %p138, %p139
      %p141 = scmp.ne.s32.totalorder %s133, %s135
      %p142 = scmp.eq.s32.totalorder %s27, 3
      %p143 = por %p141, %p142
      %p144 = scmp.ne.s32.totalorder %s135, %s136
      %p145 = scmp.eq.s32.totalorder %s27, 0
      %p146 = por %p144, %p145
      %p147 = scmp.ne.s32.totalorder %s135, %s136
      %p148 = scmp.eq.s32.totalorder %s28, 3
      %p149 = por %p147, %p148
      %p151 = scmp.ne.s32.totalorder %s136, %s150
      %p152 = scmp.eq.s32.totalorder %s28, 0
      %p153 = por %p151, %p152
      %s155 = sadd.s32 %s154, 1
      %p158 = scmp.eq.s32.totalorder %s22, 3
      %p159 = scmp.ne.s32.totalorder %s154, %s156
      %p160 = scmp.eq.s32.totalorder %s22, 0
      %p161 = por %p159, %p160
      %p162 = scmp.ne.s32.totalorder %s154, %s156
      %p163 = scmp.eq.s32.totalorder %s27, 3
      %p164 = por %p162, %p163
      %p165 = scmp.ne.s32.totalorder %s156, %s157
      %p166 = scmp.eq.s32.totalorder %s27, 0
      %p167 = por %p165, %p166
      %p168 = scmp.ne.s32.totalorder %s156, %s157
      %p169 = scmp.eq.s32.totalorder %s28, 3
      %p170 = por %p168, %p169
      %p172 = scmp.ne.s32.totalorder %s157, %s171
      %p173 = scmp.eq.s32.totalorder %s28, 0
      %p174 = por %p172, %p173
      %s176 = sadd.s32 %s175, 1
      %p179 = scmp.eq.s32.totalorder %s22, 3
      %p180 = scmp.ne.s32.totalorder %s175, %s177
      %p181 = scmp.eq.s32.totalorder %s22, 0
      %p182 = por %p180, %p181
      %p183 = scmp.ne.s32.totalorder %s175, %s177
      %p184 = scmp.eq.s32.totalorder %s27, 3
      %p185 = por %p183, %p184
      %p186 = scmp.ne.s32.totalorder %s177, %s178
      %p187 = scmp.eq.s32.totalorder %s27, 0
      %p188 = por %p186, %p187
      %p189 = scmp.ne.s32.totalorder %s177, %s178
      %p190 = scmp.eq.s32.totalorder %s28, 3
      %p191 = por %p189, %p190
      %p193 = scmp.ne.s32.totalorder %s178, %s192
      %p194 = scmp.eq.s32.totalorder %s28, 0
      %p195 = por %p193, %p194
      %s197 = sadd.s32 %s196, 1
      %p200 = scmp.eq.s32.totalorder %s22, 3
      %p201 = scmp.ne.s32.totalorder %s196, %s198
      %p202 = scmp.eq.s32.totalorder %s22, 0
      %p203 = por %p201, %p202
      %p204 = scmp.ne.s32.totalorder %s196, %s198
      %p205 = scmp.eq.s32.totalorder %s27, 3
      %p206 = por %p204, %p205
      %p207 = scmp.ne.s32.totalorder %s198, %s199
      %p208 = scmp.eq.s32.totalorder %s27, 0
      %p209 = por %p207, %p208
      %p210 = scmp.ne.s32.totalorder %s198, %s199
      %p211 = scmp.eq.s32.totalorder %s28, 3
      %p212 = por %p210, %p211
      %p214 = scmp.ne.s32.totalorder %s199, %s213
      %p215 = scmp.eq.s32.totalorder %s28, 0
      %p216 = por %p214, %p215
      %s217 = ssub.s32 %s29, %s41
      %p218 = scmp.eq.s32.totalorder %s217, 0
      %s220 = sadd.s32 %s219, 1
      %s221 = scalar_select %p218, %s219, %s220
      %p224 = pneg %p218
      %p225 = scmp.eq.s32.totalorder %s22, 3
      %p226 = por %p224, %p225
      %p227 = scmp.ne.s32.totalorder %s219, %s222
      %p228 = scmp.eq.s32.totalorder %s22, 0
      %p229 = por %p227, %p228
      %p230 = scmp.ne.s32.totalorder %s219, %s222
      %p231 = scmp.eq.s32.totalorder %s27, 3
      %p232 = por %p230, %p231
      %p233 = scmp.ne.s32.totalorder %s222, %s223
      %p234 = scmp.eq.s32.totalorder %s27, 0
      %p235 = por %p233, %p234
      %p236 = scmp.ne.s32.totalorder %s222, %s223
      %p237 = scmp.eq.s32.totalorder %s28, 3
      %p238 = por %p236, %p237
      %p240 = scmp.ne.s32.totalorder %s223, %s239
      %p241 = scmp.eq.s32.totalorder %s28, 0
      %p242 = por %p240, %p241
      %s243 = ssub.s32 %s29, %s41
      %p244 = scmp.eq.s32.totalorder %s243, 0
      %s246 = sadd.s32 %s245, 1
      %s247 = scalar_select %p244, %s245, %s246
      %p250 = pneg %p244
      %p251 = scmp.eq.s32.totalorder %s22, 3
      %p252 = por %p250, %p251
      %p253 = scmp.ne.s32.totalorder %s245, %s248
      %p254 = scmp.eq.s32.totalorder %s22, 0
      %p255 = por %p253, %p254
      %p256 = scmp.ne.s32.totalorder %s245, %s248
      %p257 = scmp.eq.s32.totalorder %s27, 3
      %p258 = por %p256, %p257
      %p259 = scmp.ne.s32.totalorder %s248, %s249
      %p260 = scmp.eq.s32.totalorder %s27, 0
      %p261 = por %p259, %p260
      %p262 = scmp.ne.s32.totalorder %s248, %s249
      %p263 = scmp.eq.s32.totalorder %s28, 3
      %p264 = por %p262, %p263
      %p266 = scmp.ne.s32.totalorder %s249, %s265
      %p267 = scmp.eq.s32.totalorder %s28, 0
      %p268 = por %p266, %p267
      %p269 = scmp.le.s32.totalorder 1, %s22
      %p270 = scmp.lt.s32.totalorder %s22, 5
      %p271 = pnand %p269, %p270
      %p272 = pneg %p271
      // Predicated region
      $region9: #{tpu_custom_call.1} parent=5 // pred_check
        _
      $region10: #{tpu_custom_call.1} parent=5 // pred_check_branch
        %274 = sbr.rel (%p271) target = $region12
      $region11: #{tpu_custom_call.1} parent=5 // pred_region
        %s275 = ssub.s32 %s22, 1
        // Predicated region
        $region13: #{tpu_custom_call.1} parent=11 // pred_check
          %p276 = pneg %p83
        $region14: #{tpu_custom_call.1} parent=11 // pred_check_branch
          %278 = sbr.rel (%p276) target = $region16
        $region15: #{tpu_custom_call.1} parent=11 // pred_region
          _
        $region16: #{tpu_custom_call.1} parent=11 // pred_fallthru
          _
        // Predicated region
        $region17: #{tpu_custom_call.1} parent=11 // pred_check
          %p279 = pneg %p104
        $region18: #{tpu_custom_call.1} parent=11 // pred_check_branch
          %281 = sbr.rel (%p279) target = $region20
        $region19: #{tpu_custom_call.1} parent=11 // pred_region
          _
        $region20: #{tpu_custom_call.1} parent=11 // pred_fallthru
          _
        // Predicated region
        $region21: #{tpu_custom_call.1} parent=11 // pred_check
          %p282 = pneg %p125
        $region22: #{tpu_custom_call.1} parent=11 // pred_check_branch
          %284 = sbr.rel (%p282) target = $region24
        $region23: #{tpu_custom_call.1} parent=11 // pred_region
          _
        $region24: #{tpu_custom_call.1} parent=11 // pred_fallthru
          _
        // Predicated region
        $region25: #{tpu_custom_call.1} parent=11 // pred_check
          %p285 = pneg %p146
        $region26: #{tpu_custom_call.1} parent=11 // pred_check_branch
          %287 = sbr.rel (%p285) target = $region28
        $region27: #{tpu_custom_call.1} parent=11 // pred_region
          _
        $region28: #{tpu_custom_call.1} parent=11 // pred_fallthru
          _
        // Predicated region
        $region29: #{tpu_custom_call.1} parent=11 // pred_check
          %p288 = pneg %p167
        $region30: #{tpu_custom_call.1} parent=11 // pred_check_branch
          %290 = sbr.rel (%p288) target = $region32
        $region31: #{tpu_custom_call.1} parent=11 // pred_region
          _
        $region32: #{tpu_custom_call.1} parent=11 // pred_fallthru
          _
        // Predicated region
        $region33: #{tpu_custom_call.1} parent=11 // pred_check
          %p291 = pneg %p188
        $region34: #{tpu_custom_call.1} parent=11 // pred_check_branch
          %293 = sbr.rel (%p291) target = $region36
        $region35: #{tpu_custom_call.1} parent=11 // pred_region
          _
        $region36: #{tpu_custom_call.1} parent=11 // pred_fallthru
          _
        // Predicated region
        $region37: #{tpu_custom_call.1} parent=11 // pred_check
          %p294 = pneg %p209
        $region38: #{tpu_custom_call.1} parent=11 // pred_check_branch
          %296 = sbr.rel (%p294) target = $region40
        $region39: #{tpu_custom_call.1} parent=11 // pred_region
          _
        $region40: #{tpu_custom_call.1} parent=11 // pred_fallthru
          _
      $region12: #{tpu_custom_call.1} parent=5 // pred_fallthru
        _
      %p297 = scmp.lt.s32.totalorder %s22, 4
      // Predicated region
      $region41: #{tpu_custom_call.1} parent=5 // pred_check
        %p298 = pneg %p297
      $region42: #{tpu_custom_call.1} parent=5 // pred_check_branch
        %300 = sbr.rel (%p298) target = $region44
      $region43: #{tpu_custom_call.1} parent=5 // pred_region
        // Predicated region
        $region45: #{tpu_custom_call.1} parent=43 // pred_check
          %p301 = pneg %p56
        $region46: #{tpu_custom_call.1} parent=43 // pred_check_branch
          %303 = sbr.rel (%p301) target = $region48
        $region47: #{tpu_custom_call.1} parent=43 // pred_region
          %s304 = sand.u32 %s46, 1
          %s305 = scalar_lea.sflag [#allocation4], %s304
          %s306 = sand.u32 %s46, 1
          %s307 = smul.addr %s306, 4
          %s308 = scalar_lea.vmem [#allocation3], %s307
          %s310 = ssub.s32 64, 64
          %311 = vsyncadd %s305, %s310
          %s312 = smul.addr %s29, 2
          %s313 = sadd.s32 %s30, %s312
          %s314 = smul.addr %s313, 64
          %s315 = scalar_lea.hbm %s0, %s314
          %s317 = sshll.u32 %s308, 4
          %s318 = int_to_ptr.vmem [resolvable:$true] %s317
          %320 = dma.hbm_to_vmem [thread:$0]  %s315, 64, %s318, %s305
        $region48: #{tpu_custom_call.1} parent=43 // pred_fallthru
          _
      $region44: #{tpu_custom_call.1} parent=5 // pred_fallthru
        _
      %p321 = scmp.le.s32.totalorder 1, %s22
      %p322 = scmp.lt.s32.totalorder %s22, 5
      %p323 = pnand %p321, %p322
      %p324 = pneg %p323
      // Predicated region
      $region49: #{tpu_custom_call.1} parent=5 // pred_check
        _
      $region50: #{tpu_custom_call.1} parent=5 // pred_check_branch
        %326 = sbr.rel (%p323) target = $region52
      $region51: #{tpu_custom_call.1} parent=5 // pred_region
        %s327 = ssub.s32 %s22, 1
        %s328 = sand.u32 %s49, 1
        %s329 = scalar_lea.sflag [#allocation4], %s328
        %s330 = sand.u32 %s49, 1
        %s331 = smul.addr %s330, 4
        %s332 = scalar_lea.vmem [#allocation3], %s331
        // Predicated region
        $region53: #{tpu_custom_call.1} parent=51 // pred_check
          %p333 = pneg %p62
        $region54: #{tpu_custom_call.1} parent=51 // pred_check_branch
          %335 = sbr.rel (%p333) target = $region56
        $region55: #{tpu_custom_call.1} parent=51 // pred_region
          %336 = dma.done %s329, 64
        $region56: #{tpu_custom_call.1} parent=51 // pred_fallthru
          _
        %s337 = sand.u32 %s49, 1
        %s338 = scalar_lea.sflag [#allocation4], %s337
        %s339 = sand.u32 %s49, 1
        %s340 = smul.addr %s339, 4
        %s341 = scalar_lea.vmem [#allocation3], %s340
        %p342 = pneg %p62
        %p343 = pneg %p59
        %p344 = pneg %p83
        %p345 = pneg %p80
        %p346 = pneg %p104
        %p347 = pneg %p101
        %p348 = pneg %p125
        %p349 = pneg %p122
        %p350 = pneg %p146
        %p351 = pneg %p143
        %p352 = pneg %p167
        %p353 = pneg %p164
        %p354 = pneg %p188
        %p355 = pneg %p185
        %p356 = pneg %p209
        %p357 = pneg %p206
        %p358 = pneg %p235
        %p359 = pneg %p232
        %s360 = sand.u32 %s222, 1
        %s361 = scalar_lea.sflag [#allocation5], %s360
        %s362 = sand.u32 %s222, 1
        %s363 = smul.addr %s362, 2
        %s364 = scalar_lea.vmem [#allocation6], %s363
        %p365 = pneg %p261
        %p366 = pneg %p258
        %p367 = scmp.lt.s32.totalorder %s31, 1
        %s368 = scalar_select %p367, %s31, 1
        %s369 = smul.addr %s368, 4
        %s370 = scalar_lea.vmem %s9, %s369
        %p371 = scmp.lt.s32.totalorder %s31, 1
        %s372 = scalar_select %p371, %s31, 1
        %s373 = smul.addr %s372, 4
        %s374 = scalar_lea.vmem %s9, %s373
        %p376 = scmp.eq.s32.totalorder %s32, 0
        // Predicated region
        $region57: #{tpu_custom_call.1} parent=51 // pred_check
          %p377 = pneg %p376
        $region58: #{tpu_custom_call.1} parent=51 // pred_check_branch
          %379 = sbr.rel (%p377) target = $region60
        $region59: #{tpu_custom_call.1} parent=51 // pred_region
          %vm380 = vcmask 11264
          %381 = vst.msk [vmem:[#allocation2] sm:$0xf] %vm380, 0.0
        $region60: #{tpu_custom_call.1} parent=51 // pred_fallthru
          _
        %v382 = vld [vmem:[%s332] sm:$0xf]
        %v383 = vpack.c.bf16 %v382, %v382
        %v384 = vld [vmem:[%s1] sm:$0x1]
        %v385 = vld [vmem:[%s2] sm:$0x3]
        %387 = vset.pattern.permute.xlu0 0
        %388 = vperm.xlu0 %387, %v385
        %v389 = vpop.permute.xlu0 %388
        %vm391 = vcmask 31744
        %v393 = vsel %vm391, %v384, 0
        %vm395 = vcmask 1041408
        %v397 = vsel %vm395, %v383, 0
        %399 = vmatprep.subr.bf16.mxu0 0
        %400 = vmatpush1.bf16.msra.mxu0 %v397
        %401 = vmatprep.subr.bf16.mxu0 0
        %402 = vmatpush1.bf16.msra.mxu0 0
        %403 = vmatprep.subr.bf16.mxu0 0
        %404 = vmatpush1.bf16.msra.mxu0 0
        %405 = vmatprep.subr.bf16.mxu0 0
        %406 = vmatpush1.bf16.msra.mxu0 0
        %407 = vmatprep.subr.bf16.mxu0 0
        %408 = vmatpush1.bf16.msra.mxu0 0
        %409 = vmatprep.subr.bf16.mxu0 0
        %410 = vmatpush1.bf16.msra.mxu0 0
        %411 = vmatprep.subr.bf16.mxu0 0
        %412 = vmatpush1.bf16.msra.mxu0 0
        %413 = vmatprep.subr.bf16.mxu0 0
        %414 = vmatpush1.bf16.msra.mxu0 0
        %415 = vmatprep.subr.bf16.mxu0 0
        %416 = vmatpush1.bf16.msra.mxu0 0
        %417 = vmatprep.subr.bf16.mxu0 0
        %418 = vmatpush1.bf16.msra.mxu0 0
        %419 = vmatprep.subr.bf16.mxu0 0
        %420 = vmatpush1.bf16.msra.mxu0 0
        %421 = vmatprep.subr.bf16.mxu0 0
        %422 = vmatpush1.bf16.msra.mxu0 0
        %423 = vmatprep.subr.bf16.mxu0 0
        %424 = vmatpush1.bf16.msra.mxu0 0
        %425 = vmatprep.subr.bf16.mxu0 0
        %426 = vmatpush1.bf16.msra.mxu0 0
        %427 = vmatprep.subr.bf16.mxu0 0
        %428 = vmatpush1.bf16.msra.mxu0 0
        %429 = vmatprep.subr.bf16.mxu0 0
        %430 = vmatpush1.bf16.msra.mxu0 0
        %431 = vmatprep.mubr.bf16.mxu0 0
        %432 = vmatmul.mubr.bf16.gmra.mrb[0].mxu0 %v393
        %v433 = vpop.f32.mrb[0].mxu0
        %v434 = vadd.f32 %v389, %v433
        %v435 = vpop.f32.mrb[0].mxu0
        %v436 = vpop.f32.mrb[0].mxu0
        %v437 = vpop.f32.mrb[0].mxu0
        %438 = vdwg.mxu0
        %v439 = vld [vmem:[%s3] sm:$0x3]
        %v440 = vld [vmem:[%s4] sm:$0xf]
        %442 = vset.pattern.permute.xlu0 0
        %443 = vperm.xlu0 %442, %v440
        %v444 = vpop.permute.xlu0 %443
        %v447 = vsel %vm391, %v439, 0
        %449 = vmatprep.subr.bf16.mxu0 0
        %450 = vmatpush1.bf16.msra.mxu0 %v397
        %451 = vmatprep.subr.bf16.mxu0 0
        %452 = vmatpush1.bf16.msra.mxu0 0
        %453 = vmatprep.subr.bf16.mxu0 0
        %454 = vmatpush1.bf16.msra.mxu0 0
        %455 = vmatprep.subr.bf16.mxu0 0
        %456 = vmatpush1.bf16.msra.mxu0 0
        %457 = vmatprep.subr.bf16.mxu0 0
        %458 = vmatpush1.bf16.msra.mxu0 0
        %459 = vmatprep.subr.bf16.mxu0 0
        %460 = vmatpush1.bf16.msra.mxu0 0
        %461 = vmatprep.subr.bf16.mxu0 0
        %462 = vmatpush1.bf16.msra.mxu0 0
        %463 = vmatprep.subr.bf16.mxu0 0
        %464 = vmatpush1.bf16.msra.mxu0 0
        %465 = vmatprep.subr.bf16.mxu0 0
        %466 = vmatpush1.bf16.msra.mxu0 0
        %467 = vmatprep.subr.bf16.mxu0 0
        %468 = vmatpush1.bf16.msra.mxu0 0
        %469 = vmatprep.subr.bf16.mxu0 0
        %470 = vmatpush1.bf16.msra.mxu0 0
        %471 = vmatprep.subr.bf16.mxu0 0
        %472 = vmatpush1.bf16.msra.mxu0 0
        %473 = vmatprep.subr.bf16.mxu0 0
        %474 = vmatpush1.bf16.msra.mxu0 0
        %475 = vmatprep.subr.bf16.mxu0 0
        %476 = vmatpush1.bf16.msra.mxu0 0
        %477 = vmatprep.subr.bf16.mxu0 0
        %478 = vmatpush1.bf16.msra.mxu0 0
        %479 = vmatprep.subr.bf16.mxu0 0
        %480 = vmatpush1.bf16.msra.mxu0 0
        %481 = vmatprep.mubr.bf16.mxu0 0
        %482 = vmatmul.mubr.bf16.gmra.mrb[0].mxu0 %v447
        %v483 = vpop.f32.mrb[0].mxu0
        %v484 = vadd.f32 %v444, %v483
        %v485 = vpop.f32.mrb[0].mxu0
        %v486 = vpop.f32.mrb[0].mxu0
        %v487 = vpop.f32.mrb[0].mxu0
        %488 = vdwg.mxu0
        %v489 = vld [vmem:[#allocation2] sm:$0xf]
        %v490 = vpack.c.bf16 %v484, %v484
        %v491 = vpack.c.bf16 %v434, %v434
        %492 = vmatprep.subr.bf16.mxu0 0
        %493 = vmatpush1.bf16.xpose.msra.mxu0 %v491
        %494 = vmatprep.subr.bf16.mxu0 0
        %495 = vmatpush1.bf16.xpose.msra.mxu0 0
        %496 = vmatprep.subr.bf16.mxu0 0
        %497 = vmatpush1.bf16.xpose.msra.mxu0 0
        %498 = vmatprep.subr.bf16.mxu0 0
        %499 = vmatpush1.bf16.xpose.msra.mxu0 0
        %500 = vmatprep.subr.bf16.mxu0 0
        %501 = vmatpush1.bf16.xpose.msra.mxu0 0
        %502 = vmatprep.subr.bf16.mxu0 0
        %503 = vmatpush1.bf16.xpose.msra.mxu0 0
        %504 = vmatprep.subr.bf16.mxu0 0
        %505 = vmatpush1.bf16.xpose.msra.mxu0 0
        %506 = vmatprep.subr.bf16.mxu0 0
        %507 = vmatpush1.bf16.xpose.msra.mxu0 0
        %508 = vmatprep.subr.bf16.mxu0 0
        %509 = vmatpush1.bf16.xpose.msra.mxu0 0
        %510 = vmatprep.subr.bf16.mxu0 0
        %511 = vmatpush1.bf16.xpose.msra.mxu0 0
        %512 = vmatprep.subr.bf16.mxu0 0
        %513 = vmatpush1.bf16.xpose.msra.mxu0 0
        %514 = vmatprep.subr.bf16.mxu0 0
        %515 = vmatpush1.bf16.xpose.msra.mxu0 0
        %516 = vmatprep.subr.bf16.mxu0 0
        %517 = vmatpush1.bf16.xpose.msra.mxu0 0
        %518 = vmatprep.subr.bf16.mxu0 0
        %519 = vmatpush1.bf16.xpose.msra.mxu0 0
        %520 = vmatprep.subr.bf16.mxu0 0
        %521 = vmatpush1.bf16.xpose.msra.mxu0 0
        %522 = vmatprep.subr.bf16.mxu0 0
        %523 = vmatpush1.bf16.xpose.msra.mxu0 0
        %524 = vmatprep.mubr.bf16.mxu0 0
        %525 = vmatmul.mubr.bf16.gmra.mrb[0].mxu0 %v490
        %v526 = vpop.f32.mrb[0].mxu0
        %v527 = vadd.f32 0.0, %v526
        %v528 = vpop.f32.mrb[0].mxu0
        %v529 = vpop.f32.mrb[0].mxu0
        %v530 = vpop.f32.mrb[0].mxu0
        %531 = vdwg.mxu0
        %v532 = vadd.f32 %v489, %v527
        %vm533 = vcmask 11264
        %534 = vst.msk [vmem:[#allocation2] sm:$0xf] %vm533, %v532
        %p535 = scmp.eq.s32.totalorder %s32, 1
        // Predicated region
        $region61: #{tpu_custom_call.1} parent=51 // pred_check
          %p536 = pneg %p535
        $region62: #{tpu_custom_call.1} parent=51 // pred_check_branch
          %538 = sbr.rel (%p536) target = $region64
        $region63: #{tpu_custom_call.1} parent=51 // pred_region
          %v539 = vld [vmem:[#allocation2] sm:$0xf]
          %v540 = vld [vmem:[%s5] sm:$0x3]
          %vm541 = vcmask 15360
          %v543 = vsel %vm541, %v539, 0
          %v546 = vsel %vm395, %v540, 0
          %548 = vmatprep.subr.mxu0 0.0
          %549 = vmatpush1.msra.mxu0 %v546
          %550 = vmatprep.subr.mxu0 0.0
          %551 = vmatpush1.msra.mxu0 0.0
          %552 = vmatprep.subr.mxu0 0.0
          %553 = vmatpush1.msra.mxu0 0.0
          %554 = vmatprep.subr.mxu0 0.0
          %555 = vmatpush1.msra.mxu0 0.0
          %556 = vmatprep.subr.mxu0 0.0
          %557 = vmatpush1.msra.mxu0 0.0
          %558 = vmatprep.subr.mxu0 0.0
          %559 = vmatpush1.msra.mxu0 0.0
          %560 = vmatprep.subr.mxu0 0.0
          %561 = vmatpush1.msra.mxu0 0.0
          %562 = vmatprep.subr.mxu0 0.0
          %563 = vmatpush1.msra.mxu0 0.0
          %564 = vmatprep.subr.mxu0 0.0
          %565 = vmatpush1.msra.mxu0 0.0
          %566 = vmatprep.subr.mxu0 0.0
          %567 = vmatpush1.msra.mxu0 0.0
          %568 = vmatprep.subr.mxu0 0.0
          %569 = vmatpush1.msra.mxu0 0.0
          %570 = vmatprep.subr.mxu0 0.0
          %571 = vmatpush1.msra.mxu0 0.0
          %572 = vmatprep.subr.mxu0 0.0
          %573 = vmatpush1.msra.mxu0 0.0
          %574 = vmatprep.subr.mxu0 0.0
          %575 = vmatpush1.msra.mxu0 0.0
          %576 = vmatprep.subr.mxu0 0.0
          %577 = vmatpush1.msra.mxu0 0.0
          %578 = vmatprep.subr.mxu0 0.0
          %579 = vmatpush1.msra.mxu0 0.0
          %580 = vmatprep.subr.mxu0 0.0
          %581 = vmatpush1.msra.mxu0 0.0
          %582 = vmatprep.subr.mxu0 0.0
          %583 = vmatpush1.msra.mxu0 0.0
          %584 = vmatprep.subr.mxu0 0.0
          %585 = vmatpush1.msra.mxu0 0.0
          %586 = vmatprep.subr.mxu0 0.0
          %587 = vmatpush1.msra.mxu0 0.0
          %588 = vmatprep.subr.mxu0 0.0
          %589 = vmatpush1.msra.mxu0 0.0
          %590 = vmatprep.subr.mxu0 0.0
          %591 = vmatpush1.msra.mxu0 0.0
          %592 = vmatprep.subr.mxu0 0.0
          %593 = vmatpush1.msra.mxu0 0.0
          %594 = vmatprep.subr.mxu0 0.0
          %595 = vmatpush1.msra.mxu0 0.0
          %596 = vmatprep.subr.mxu0 0.0
          %597 = vmatpush1.msra.mxu0 0.0
          %598 = vmatprep.subr.mxu0 0.0
          %599 = vmatpush1.msra.mxu0 0.0
          %600 = vmatprep.subr.mxu0 0.0
          %601 = vmatpush1.msra.mxu0 0.0
          %602 = vmatprep.subr.mxu0 0.0
          %603 = vmatpush1.msra.mxu0 0.0
          %604 = vmatprep.subr.mxu0 0.0
          %605 = vmatpush1.msra.mxu0 0.0
          %606 = vmatprep.subr.mxu0 0.0
          %607 = vmatpush1.msra.mxu0 0.0
          %608 = vmatprep.subr.mxu0 0.0
          %609 = vmatpush1.msra.mxu0 0.0
          %610 = vmatprep.subr.mxu0 0.0
          %611 = vmatpush1.msra.mxu0 0.0
          %612 = vmatprep.mubr.f32.mxu0 0.0
          %613 = vmatmul.mubr.f32.gmra.mrb[0].mxu0 %v543
          %v614 = vpop.f32.mrb[0].mxu0
          %v615 = vadd.f32 0.0, %v614
          %v616 = vpop.f32.mrb[0].mxu0
          %617 = vdwg.mxu0
          %v618 = vpack.c.bf16 %v615, %v615
          %vm619 = vcmask 25600
          %620 = vst.msk [vmem:[%s364] sm:$0x3] %vm619, %v618
          %v621 = vld [vmem:[%s6] sm:$0x1]
          %v623 = vlaneseq
          %v624 = vshrl.u32 %v623, 7
          %v625 = vsub.s32 0, %v624
          %v626 = vrot.slane %v621, %v625
          %v628 = vmul.f32 %v539, %v626
          %v629 = vsel %vm533, %v628, 0.0
          %630 = vadd.xlane.f32.xlu0 %v629
          %v631 = vpop.xlane.xlu0 %630
          %v632 = vld [vmem:[%s7] sm:$0xf]
          %v633 = vadd.f32 %v631, %v632
          %vm634 = vcmask 3072
          %635 = vst.msk [vmem:[%s374] sm:$0xf] %vm634, %v633
        $region64: #{tpu_custom_call.1} parent=51 // pred_fallthru
          _
        %s636 = sand.u32 %s222, 1
        %s637 = scalar_lea.sflag [#allocation5], %s636
        %s638 = sand.u32 %s222, 1
        %s639 = smul.addr %s638, 2
        %s640 = scalar_lea.vmem [#allocation6], %s639
        %p641 = scmp.lt.s32.totalorder %s31, 1
        %s642 = scalar_select %p641, %s31, 1
        %s643 = smul.addr %s642, 4
        %s644 = scalar_lea.vmem %s9, %s643
        // Predicated region
        $region65: #{tpu_custom_call.1} parent=51 // pred_check
          %p645 = pneg %p232
        $region66: #{tpu_custom_call.1} parent=51 // pred_check_branch
          %647 = sbr.rel (%p645) target = $region68
        $region67: #{tpu_custom_call.1} parent=51 // pred_region
          %s649 = ssub.s32 32, 32
          %650 = vsyncadd %s637, %s649
          %s651 = smul.addr %s31, 32
          %s652 = scalar_lea.hbm %s8, %s651
          %s654 = sshll.u32 %s640, 4
          %s655 = int_to_ptr.vmem [resolvable:$true] %s654
          %657 = dma.vmem_to_hbm [thread:$0]  %s655, 32, %s652, %s637
        $region68: #{tpu_custom_call.1} parent=51 // pred_fallthru
          _
        // Predicated region
        $region69: #{tpu_custom_call.1} parent=51 // pred_check
          %p658 = pneg %p258
        $region70: #{tpu_custom_call.1} parent=51 // pred_check_branch
          %660 = sbr.rel (%p658) target = $region72
        $region71: #{tpu_custom_call.1} parent=51 // pred_region
          _
        $region72: #{tpu_custom_call.1} parent=51 // pred_fallthru
          _
      $region52: #{tpu_custom_call.1} parent=5 // pred_fallthru
        _
      %p661 = scmp.le.s32.totalorder 2, %s22
      // Predicated region
      $region73: #{tpu_custom_call.1} parent=5 // pred_check
        %p662 = pneg %p661
      $region74: #{tpu_custom_call.1} parent=5 // pred_check_branch
        %664 = sbr.rel (%p662) target = $region76
      $region75: #{tpu_custom_call.1} parent=5 // pred_region
        %s665 = ssub.s32 %s22, 2
        // Predicated region
        $region77: #{tpu_custom_call.1} parent=75 // pred_check
          %p666 = pneg %p238
        $region78: #{tpu_custom_call.1} parent=75 // pred_check_branch
          %668 = sbr.rel (%p666) target = $region80
        $region79: #{tpu_custom_call.1} parent=75 // pred_region
          %s669 = sand.u32 %s223, 1
          %s670 = scalar_lea.sflag [#allocation5], %s669
          %s671 = sand.u32 %s223, 1
          %s672 = smul.addr %s671, 2
          %s673 = scalar_lea.vmem [#allocation6], %s672
          %674 = dma.done %s670, 32
        $region80: #{tpu_custom_call.1} parent=75 // pred_fallthru
          _
        // Predicated region
        $region81: #{tpu_custom_call.1} parent=75 // pred_check
          %p675 = pneg %p264
        $region82: #{tpu_custom_call.1} parent=75 // pred_check_branch
          %677 = sbr.rel (%p675) target = $region84
        $region83: #{tpu_custom_call.1} parent=75 // pred_region
          %p678 = scmp.lt.s32.totalorder %s33, 1
          %s679 = scalar_select %p678, %s33, 1
          %s680 = smul.addr %s679, 4
          %s681 = scalar_lea.vmem %s9, %s680
        $region84: #{tpu_custom_call.1} parent=75 // pred_fallthru
          _
      $region76: #{tpu_custom_call.1} parent=5 // pred_fallthru
        _
    $region6: #{tpu_custom_call.1} parent=1 // loop_footer
      %s26 = sadd.s32 1, %s22
    $region7: #{tpu_custom_call.1} parent=1 // loop_footer_branch
      %21 = sbr.rel target = $region3
    $region8: #{tpu_custom_call.1} parent=1 // loop_exit
      _
    %682 = vsyncpa [#allocation4], 1
    %s683 = scalar_lea.sflag [#allocation4], 1
    %684 = vsyncpa %s683, 1
    %685 = vsyncpa [#allocation5], 1
    %s686 = scalar_lea.sflag [#allocation5], 1
    %687 = vsyncpa %s686, 1

</llo_original>
